<compile_context>
chip_gen: v7x
topology: tpu7x:2x2x1
jax: 0.10.0
libtpu: 0.0.40
codegen_flags: <defaults>
</compile_context>

<pallas_src>
import jax
import jax.numpy as jnp
from jax.experimental import pallas as pl
from jax.experimental.pallas import tpu as pltpu


def _round_up(x, m):
    return (x + m - 1) // m * m


def _make_linear_kernel(compute_dtype):
    def kernel(x_ref, w_ref, b_ref, o_ref):
        # x_ref: (TM, H)   w_ref: (H, TN)   b_ref: (1, TN) f32   o_ref: (TM, TN)
        x = x_ref[...]
        if compute_dtype is not None:
            # In-kernel cast: x streams from HBM at its stored width; the VPU
            # cast overlaps with the MXU instead of being a separate XLA pass.
            x = x.astype(compute_dtype)
        acc = jnp.dot(x, w_ref[...], preferred_element_type=jnp.float32)
        o_ref[...] = (acc + b_ref[...]).astype(o_ref.dtype)
    return kernel


def sequence_wise_linear(x, weight_t, bias, *, compute_dtype=None,
                         block_m=512, block_n=256,
                         weight_resident_bytes=8 * 1024 * 1024,
                         vmem_limit_bytes=48 * 1024 * 1024):
    """Apply Linear(H, H_out) time-and-batch-wise (SequenceWise semantics).

    Args:
      x:             (T, N, H)
      weight_t:      (H, H_out)   transposed PyTorch weight (so we do x @ W)
      bias:          (H_out,)
      compute_dtype: if set (e.g. jnp.bfloat16), x is cast inside the kernel
                     and the weight pre-cast once; accumulation stays f32 and
                     the output keeps x.dtype.
      block_m:       row tile (T*N axis). 512 fits v7x VMEM; sweep 1024/2048
                     on v5e/v6e (raise vmem_limit_bytes accordingly).
      block_n:       output-column tile (multiple of 128) used only when the
                     weight does not fit VMEM-resident.
      weight_resident_bytes: if the (padded) weight slab is <= this, keep it
                     VMEM-resident for the whole grid (1-D grid over rows).
      vmem_limit_bytes: Mosaic scoped-VMEM limit.
    Returns:
      (T, N, H_out)
    """
    t, n, h = x.shape
    h_out = weight_t.shape[1]
    out_dtype = x.dtype
    m = t * n

    x2d = x.reshape(m, h)                       # collapse TxNxH -> (T*N)xH (glue)

    if compute_dtype is not None:
        weight_t = weight_t.astype(compute_dtype)   # small; folded/cached under jit
    bias_f32 = bias.astype(jnp.float32)

    # Pad only the small weight/bias column dim to a multiple of 128 so output
    # stores are lane-dense (unmasked vst). The M axis is NOT padded.
    n_pad = _round_up(h_out, 128)
    if n_pad != h_out:
        weight_t = jnp.pad(weight_t, ((0, 0), (0, n_pad - h_out)))
        bias_f32 = jnp.pad(bias_f32, (0, n_pad - h_out))
    b2d = bias_f32.reshape(1, n_pad)

    # Row tile: multiple of 16 (safe sublane packing for f32 and bf16).
    tm = min(block_m, _round_up(m, 16))
    m_tiles = pl.cdiv(m, tm)                    # ragged last block is masked

    w_itemsize = weight_t.dtype.itemsize
    weight_resident = h * n_pad * w_itemsize <= weight_resident_bytes

    if weight_resident:
        # Single grid axis over rows; weight/bias keep a constant block index
        # -> fetched once, VMEM-resident for the whole grid.
        tn = n_pad
        grid = (m_tiles,)
        x_spec = pl.BlockSpec((tm, h), lambda i: (i, 0))
        w_spec = pl.BlockSpec((h, tn), lambda i: (0, 0))
        b_spec = pl.BlockSpec((1, tn), lambda i: (0, 0))
        o_spec = pl.BlockSpec((tm, tn), lambda i: (i, 0))
        dims = ("parallel",)
        w_fetches = 1
    else:
        # Large H_out fallback: tile output columns too (M outer, N inner so x
        # is fetched once per row tile; weight refetch = W_bytes * m_tiles).
        tn = min(block_n, n_pad)
        grid = (m_tiles, pl.cdiv(n_pad, tn))
        x_spec = pl.BlockSpec((tm, h), lambda i, j: (i, 0))
        w_spec = pl.BlockSpec((h, tn), lambda i, j: (0, j))
        b_spec = pl.BlockSpec((1, tn), lambda i, j: (0, j))
        o_spec = pl.BlockSpec((tm, tn), lambda i, j: (i, j))
        dims = ("parallel", "parallel")
        w_fetches = m_tiles

    x_bytes = int(x2d.size) * x2d.dtype.itemsize
    w_bytes = int(weight_t.size) * w_itemsize
    o_bytes = m * n_pad * jnp.dtype(out_dtype).itemsize
    cost = pl.CostEstimate(
        flops=2 * m * h * n_pad,
        transcendentals=0,
        bytes_accessed=x_bytes + w_bytes * w_fetches + o_bytes,
    )

    out2d = pl.pallas_call(
        _make_linear_kernel(compute_dtype),
        out_shape=jax.ShapeDtypeStruct((m, n_pad), out_dtype),
        grid_spec=pltpu.PrefetchScalarGridSpec(
            num_scalar_prefetch=0,
            grid=grid,
            in_specs=[x_spec, w_spec, b_spec],
            out_specs=o_spec,
        ),
        compiler_params=pltpu.CompilerParams(
            dimension_semantics=dims,
            vmem_limit_bytes=vmem_limit_bytes,
        ),
        cost_estimate=cost,
    )(x2d, weight_t, b2d)

    if n_pad != h_out:
        out2d = out2d[:, :h_out]                # drop padded columns only
    return out2d.reshape(t, n, h_out)           # expand back to TxNxH_out (glue)


if __name__ == "__main__":
    # Small shapes consistent with a TxNxH input.
    T, N, H, H_OUT = 8, 2, 32, 32

    key = jax.random.PRNGKey(0)
    kx, kw, kb, kx2 = jax.random.split(key, 4)

    x = jax.random.normal(kx, (T, N, H), dtype=jnp.float32)

    # Deterministic parameter init mimicking nn.Linear: U(-1/sqrt(H), 1/sqrt(H))
    bound = 1.0 / jnp.sqrt(jnp.float32(H))
    weight = jax.random.uniform(kw, (H_OUT, H), jnp.float32, -bound, bound)  # PyTorch layout
    bias = jax.random.uniform(kb, (H_OUT,), jnp.float32, -bound, bound)
    weight_t = weight.T  # (H, H_OUT) for x @ W

    # Reference (plain JAX, same semantics as the PyTorch module).
    ref = (x.reshape(T * N, H) @ weight_t + bias).reshape(T, N, H_OUT)

    # f32 compute path, weight-resident 1-D grid: exact-ish match.
    out_f32 = jax.block_until_ready(sequence_wise_linear(x, weight_t, bias))
    assert out_f32.shape == (T, N, H_OUT)
    assert jnp.allclose(out_f32, ref, atol=1e-5, rtol=1e-5)

    # bf16 compute path (in-kernel cast, f32 MXU accumulation): looser tolerance.
    out_bf16 = jax.block_until_ready(
        sequence_wise_linear(x, weight_t, bias, compute_dtype=jnp.bfloat16))
    assert out_bf16.shape == (T, N, H_OUT)
    assert jnp.allclose(out_bf16, ref, atol=3e-2, rtol=3e-2)

    # 2-D grid fallback path (force non-resident weight): exercises N tiling.
    out_2d = jax.block_until_ready(
        sequence_wise_linear(x, weight_t, bias, weight_resident_bytes=0))
    assert out_2d.shape == (T, N, H_OUT)
    assert jnp.allclose(out_2d, ref, atol=1e-5, rtol=1e-5)

    # Ragged M path (m not a multiple of block_m): no wrapper-side padding.
    T2, N2 = 9, 3  # m = 27, block_m = 16 -> 2 row tiles, last one ragged
    x_rag = jax.random.normal(kx2, (T2, N2, H), dtype=jnp.float32)
    ref_rag = (x_rag.reshape(T2 * N2, H) @ weight_t + bias).reshape(T2, N2, H_OUT)
    out_rag = jax.block_until_ready(
        sequence_wise_linear(x_rag, weight_t, bias, block_m=16))
    assert out_rag.shape == (T2, N2, H_OUT)
    assert jnp.allclose(out_rag, ref_rag, atol=1e-5, rtol=1e-5)

    print("KERNEL_OK")
</pallas_src>

<mosaic_0001>
module attributes {stable_mosaic.version = 11 : i64} {
  func.func @kernel(%arg0: i32, %arg1: memref<16x32xf32, #tpu.memory_space<vmem>>, %arg2: memref<32x128xf32, #tpu.memory_space<vmem>>, %arg3: memref<1x128xf32, #tpu.memory_space<vmem>>, %arg4: memref<16x128xf32, #tpu.memory_space<vmem>>) attributes {dimension_semantics = [#tpu.dimension_semantics<parallel>], iteration_bounds = array<i64: 1>, scalar_prefetch = 0 : i64, scratch_operands = 0 : i64, tpu.core_type = #tpu.core_type<tc>, window_params = [{transform_indices = @transform_0, window_bounds = array<i64: 16, 32>}, {pipeline_mode = #tpu.pipeline_mode<synchronous>, transform_indices = @transform_1, window_bounds = array<i64: 32, 128>}, {pipeline_mode = #tpu.pipeline_mode<synchronous>, transform_indices = @transform_2, window_bounds = array<i64: 1, 128>}, {transform_indices = @transform_3, window_bounds = array<i64: 16, 128>}]} {
    %c0 = arith.constant 0 : index
    %c0_0 = arith.constant 0 : index
    %0 = vector.load %arg1[%c0, %c0_0] : memref<16x32xf32, #tpu.memory_space<vmem>>, vector<16x32xf32>
    %c0_1 = arith.constant 0 : index
    %c0_2 = arith.constant 0 : index
    %1 = vector.load %arg2[%c0_1, %c0_2] : memref<32x128xf32, #tpu.memory_space<vmem>>, vector<32x128xf32>
    %cst = arith.constant dense<0.000000e+00> : vector<16x128xf32>
    %2 = tpu.matmul %0, %1, %cst {dimension_numbers = #tpu.dot_dimension_numbers<[1], [0], [0], [1], [0, 0, 1, 1], [], []>} : vector<16x32xf32>, vector<32x128xf32>, vector<16x128xf32> -> vector<16x128xf32>
    %c0_3 = arith.constant 0 : index
    %c0_4 = arith.constant 0 : index
    %3 = vector.load %arg3[%c0_3, %c0_4] : memref<1x128xf32, #tpu.memory_space<vmem>>, vector<1x128xf32>
    %4 = vector.broadcast %3 : vector<1x128xf32> to vector<16x128xf32>
    %5 = arith.addf %2, %4 : vector<16x128xf32>
    %c0_5 = arith.constant 0 : index
    %c0_6 = arith.constant 0 : index
    %6 = vector.load %arg4[%c0_5, %c0_6] : memref<16x128xf32, #tpu.memory_space<vmem>>, vector<16x128xf32>
    tpu.vector_store %arg4[%c0_5, %c0_6], %5 {strides = array<i32>} : memref<16x128xf32, #tpu.memory_space<vmem>>, vector<16x128xf32>,
    return
  }
  func.func @transform_0(%arg0: i32) -> (i32, i32) {
    %c0_i32 = arith.constant 0 : i32
    %c0_i32_0 = arith.constant 0 : i32
    return %arg0, %c0_i32 : i32, i32
  }
  func.func @transform_1(%arg0: i32) -> (i32, i32) {
    %c0_i32 = arith.constant 0 : i32
    %c0_i32_0 = arith.constant 0 : i32
    %c0_i32_1 = arith.constant 0 : i32
    return %c0_i32, %c0_i32_0 : i32, i32
  }
  func.func @transform_2(%arg0: i32) -> (i32, i32) {
    %c0_i32 = arith.constant 0 : i32
    %c0_i32_0 = arith.constant 0 : i32
    %c0_i32_1 = arith.constant 0 : i32
    return %c0_i32, %c0_i32_0 : i32, i32
  }
  func.func @transform_3(%arg0: i32) -> (i32, i32) {
    %c0_i32 = arith.constant 0 : i32
    %c0_i32_0 = arith.constant 0 : i32
    return %arg0, %c0_i32 : i32, i32
  }
}

</mosaic_0001>

<llo_original>
// kernel: tpu_custom_call.1
$region0: #{tpu_custom_call.1}
  #allocation0 [shape = 'u32[]', space=smem, size = 0x4, offset = 0x4, fixed_abs, tag = 'smem constant byte address 0x4 - core index']
  #allocation1 [shape = 'u32[144,128]{1,0:T(1,128)}', space=vmem, size = 0x12000, scoped, tag = 'internal scratch']
  %s0 = inlined_call_operand.hbm [shape: f32[16,32], index: 0, kind: input, shape index: {}]
  %s1 = inlined_call_operand.hbm [shape: f32[32,128], index: 1, kind: input, shape index: {}]
  %s2 = inlined_call_operand.vmem [shape: f32[1,128], index: 2, kind: input, shape index: {}]
  %s3 = inlined_call_operand.hbm [shape: f32[16,128], index: 3, kind: output, shape index: {}]
  %s4 = sld [smem:[#allocation0]]
  $region30: #{tpu_custom_call.1} parent=0
    _
  %s6 = ssub.s32 1, %s4
  %s7 = scalar_select 0, %s6, %s4
  $region1: #{tpu_custom_call.1} parent=0
    #allocation2 [shape = 'u8[8192]{0}', space=vmem, size = 0x2000, scoped, tag = 'input window, operand 0, single buffered']
    #allocation3 [shape = 's32[1]{0}', space=sflag, size = 0x4, scoped, tag = 'scoped memory for tpu_custom_call.1']
    #allocation4 [shape = 's32[1]{0}', space=sflag, size = 0x4, scoped, tag = 'scoped memory for tpu_custom_call.1']
    #allocation5 [shape = 'u8[16384]{0}', space=vmem, size = 0x4000, scoped, tag = 'input window, operand 1, single buffered']
    #allocation6 [shape = 's32[1]{0}', space=sflag, size = 0x4, scoped, tag = 'scoped memory for tpu_custom_call.1']
    #allocation7 [shape = 'u8[8192]{0}', space=vmem, size = 0x2000, scoped, tag = 'output window, operand 0, single buffered']
    %8 = vsyncpa [#allocation3], 0
    %9 = vsyncpa [#allocation6], 0
    %10 = vsyncpa [#allocation4], 0
    // Predicated region
    $region2: #{tpu_custom_call.1} parent=1 // pred_check
      _
    $region3: #{tpu_custom_call.1} parent=1 // pred_check_branch
      %12 = sbr.rel (0) target = $region5
    $region4: #{tpu_custom_call.1} parent=1 // pred_region
      %s14 = ssub.s32 256, 256
      %15 = vsyncadd [#allocation3], %s14
      %s16 = sshll.u32 [#allocation2], 4
      %s17 = int_to_ptr.vmem [resolvable:$true] %s16
      %22 = dma.hbm_to_vmem [thread:$0]  %s0, 256, %s17, [#allocation3], 128, 128, 8
    $region5: #{tpu_custom_call.1} parent=1 // pred_fallthru
      _
    // Predicated region
    $region6: #{tpu_custom_call.1} parent=1 // pred_check
      _
    $region7: #{tpu_custom_call.1} parent=1 // pred_check_branch
      %24 = sbr.rel (0) target = $region9
    $region8: #{tpu_custom_call.1} parent=1 // pred_region
      %s26 = ssub.s32 512, 512
      %27 = vsyncadd [#allocation6], %s26
      %s28 = sshll.u32 [#allocation5], 4
      %s29 = int_to_ptr.vmem [resolvable:$true] %s28
      %34 = dma.hbm_to_vmem [thread:$0]  %s1, 512, %s29, [#allocation6], 128, 128, 8
    $region9: #{tpu_custom_call.1} parent=1 // pred_fallthru
      _
    // Predicated region
    $region10: #{tpu_custom_call.1} parent=1 // pred_check
      _
    $region11: #{tpu_custom_call.1} parent=1 // pred_check_branch
      %36 = sbr.rel (0) target = $region13
    $region12: #{tpu_custom_call.1} parent=1 // pred_region
      _
    $region13: #{tpu_custom_call.1} parent=1 // pred_fallthru
      _
    // Predicated region
    $region14: #{tpu_custom_call.1} parent=1 // pred_check
      _
    $region15: #{tpu_custom_call.1} parent=1 // pred_check_branch
      %38 = sbr.rel (0) target = $region17
    $region16: #{tpu_custom_call.1} parent=1 // pred_region
      %39 = dma.done [#allocation3], 256
    $region17: #{tpu_custom_call.1} parent=1 // pred_fallthru
      _
    // Predicated region
    $region18: #{tpu_custom_call.1} parent=1 // pred_check
      _
    $region19: #{tpu_custom_call.1} parent=1 // pred_check_branch
      %41 = sbr.rel (0) target = $region21
    $region20: #{tpu_custom_call.1} parent=1 // pred_region
      %42 = dma.done [#allocation6], 512
    $region21: #{tpu_custom_call.1} parent=1 // pred_fallthru
      _
    %v43 = vld [vmem:[#allocation2] sm:$0xff]
    %v44 = vld [vmem:[#allocation2 + $0x8] sm:$0xff]
    %v45 = vld [vmem:[#allocation5] sm:$0xff]
    %v46 = vld [vmem:[#allocation5 + $0x8] sm:$0xff]
    %v47 = vld [vmem:[#allocation5 + $0x10] sm:$0xff]
    %v48 = vld [vmem:[#allocation5 + $0x18] sm:$0xff]
    %v49 = vld [vmem:[%s2] sm:$0x1]
    %v51 = vlaneseq
    %v52 = vshrl.u32 %v51, 7
    %v53 = vsub.s32 0, %v52
    %v54 = vrot.slane %v49, %v53
    %vm56 = vcmask 261120
    %v58 = vsel %vm56, %v43, 0
    %v61 = vsel %vm56, %v44, 0
    %63 = vmatprep.subr.mxu0 0.0
    %64 = vmatpush1.msra.mxu0 %v45
    %65 = vmatprep.subr.mxu0 0.0
    %66 = vmatpush1.msra.mxu0 %v46
    %67 = vmatprep.subr.mxu0 0.0
    %68 = vmatpush1.msra.mxu0 %v47
    %69 = vmatprep.subr.mxu0 0.0
    %70 = vmatpush1.msra.mxu0 %v48
    %71 = vmatprep.subr.mxu0 0.0
    %72 = vmatpush1.msra.mxu0 0.0
    %73 = vmatprep.subr.mxu0 0.0
    %74 = vmatpush1.msra.mxu0 0.0
    %75 = vmatprep.subr.mxu0 0.0
    %76 = vmatpush1.msra.mxu0 0.0
    %77 = vmatprep.subr.mxu0 0.0
    %78 = vmatpush1.msra.mxu0 0.0
    %79 = vmatprep.subr.mxu0 0.0
    %80 = vmatpush1.msra.mxu0 0.0
    %81 = vmatprep.subr.mxu0 0.0
    %82 = vmatpush1.msra.mxu0 0.0
    %83 = vmatprep.subr.mxu0 0.0
    %84 = vmatpush1.msra.mxu0 0.0
    %85 = vmatprep.subr.mxu0 0.0
    %86 = vmatpush1.msra.mxu0 0.0
    %87 = vmatprep.subr.mxu0 0.0
    %88 = vmatpush1.msra.mxu0 0.0
    %89 = vmatprep.subr.mxu0 0.0
    %90 = vmatpush1.msra.mxu0 0.0
    %91 = vmatprep.subr.mxu0 0.0
    %92 = vmatpush1.msra.mxu0 0.0
    %93 = vmatprep.subr.mxu0 0.0
    %94 = vmatpush1.msra.mxu0 0.0
    %95 = vmatprep.subr.mxu0 0.0
    %96 = vmatpush1.msra.mxu0 0.0
    %97 = vmatprep.subr.mxu0 0.0
    %98 = vmatpush1.msra.mxu0 0.0
    %99 = vmatprep.subr.mxu0 0.0
    %100 = vmatpush1.msra.mxu0 0.0
    %101 = vmatprep.subr.mxu0 0.0
    %102 = vmatpush1.msra.mxu0 0.0
    %103 = vmatprep.subr.mxu0 0.0
    %104 = vmatpush1.msra.mxu0 0.0
    %105 = vmatprep.subr.mxu0 0.0
    %106 = vmatpush1.msra.mxu0 0.0
    %107 = vmatprep.subr.mxu0 0.0
    %108 = vmatpush1.msra.mxu0 0.0
    %109 = vmatprep.subr.mxu0 0.0
    %110 = vmatpush1.msra.mxu0 0.0
    %111 = vmatprep.subr.mxu0 0.0
    %112 = vmatpush1.msra.mxu0 0.0
    %113 = vmatprep.subr.mxu0 0.0
    %114 = vmatpush1.msra.mxu0 0.0
    %115 = vmatprep.subr.mxu0 0.0
    %116 = vmatpush1.msra.mxu0 0.0
    %117 = vmatprep.subr.mxu0 0.0
    %118 = vmatpush1.msra.mxu0 0.0
    %119 = vmatprep.subr.mxu0 0.0
    %120 = vmatpush1.msra.mxu0 0.0
    %121 = vmatprep.subr.mxu0 0.0
    %122 = vmatpush1.msra.mxu0 0.0
    %123 = vmatprep.subr.mxu0 0.0
    %124 = vmatpush1.msra.mxu0 0.0
    %125 = vmatprep.subr.mxu0 0.0
    %126 = vmatpush1.msra.mxu0 0.0
    %127 = vmatprep.mubr.f32.mxu0 0.0
    %128 = vmatmul.mubr.f32.gmra.mrb[0].mxu0 %v58
    %v129 = vpop.f32.mrb[0].mxu0
    %v130 = vadd.f32 %v54, %v129
    %v131 = vpop.f32.mrb[0].mxu0
    %132 = vmatprep.mubr.f32.mxu0 0.0
    %133 = vmatmul.mubr.f32.gmra.mrb[0].mxu0 %v61
    %v134 = vpop.f32.mrb[0].mxu0
    %v135 = vadd.f32 %v54, %v134
    %v136 = vpop.f32.mrb[0].mxu0
    %137 = vdwg.mxu0
    %138 = vst [vmem:[#allocation7] sm:$0xff] %v130
    %139 = vst [vmem:[#allocation7 + $0x8] sm:$0xff] %v135
    // Predicated region
    $region22: #{tpu_custom_call.1} parent=1 // pred_check
      _
    $region23: #{tpu_custom_call.1} parent=1 // pred_check_branch
      %141 = sbr.rel (0) target = $region25
    $region24: #{tpu_custom_call.1} parent=1 // pred_region
      %s143 = ssub.s32 256, 256
      %144 = vsyncadd [#allocation4], %s143
      %s145 = sshll.u32 [#allocation7], 4
      %s146 = int_to_ptr.vmem [resolvable:$true] %s145
      %151 = dma.vmem_to_hbm [thread:$0]  %s146, 256, %s3, [#allocation4], 128, 128, 8
    $region25: #{tpu_custom_call.1} parent=1 // pred_fallthru
      _
    // Predicated region
    $region26: #{tpu_custom_call.1} parent=1 // pred_check
      _
    $region27: #{tpu_custom_call.1} parent=1 // pred_check_branch
      %153 = sbr.rel (0) target = $region29
    $region28: #{tpu_custom_call.1} parent=1 // pred_region
      %154 = dma.done [#allocation4], 256
    $region29: #{tpu_custom_call.1} parent=1 // pred_fallthru
      _
    %155 = vsyncpa [#allocation3], 1
    %156 = vsyncpa [#allocation6], 1
    %157 = vsyncpa [#allocation4], 1

</llo_original>
